<compile_context>
chip_gen: v7x
topology: tpu7x:2x2x1
jax: 0.10.0
libtpu: 0.0.40
codegen_flags: <defaults>
</compile_context>

<pallas_src>
import functools

import jax
import jax.numpy as jnp
from jax.experimental import pallas as pl
from jax.experimental.pallas import tpu as pltpu

LANES = 128
TARGET_TILE_BYTES = 2 << 20   # ~2 MiB per input tile, in the input's native dtype


def _dice_kernel(p_ref, t_ref, o_ref, acc_pt_ref, acc_s_ref, *,
                 rows, tile_rows, steps_per_split, full_blocks, need_mask):
    s = pl.program_id(0)          # parallel split (TensorCore shard on v7x)
    k = pl.program_id(1)          # sequential reduction axis

    @pl.when(k == 0)
    def _():
        acc_pt_ref[...] = jnp.zeros_like(acc_pt_ref)
        acc_s_ref[...] = jnp.zeros_like(acc_s_ref)

    p = p_ref[...].astype(jnp.float32)
    t = t_ref[...].astype(jnp.float32)
    sub = tile_rows // 8

    def tree8(x):
        # (tile_rows, 128) -> (8, 128) partial reduce; keeps the accumulator
        # tiny so per-step accumulator vld/vst traffic is negligible.
        if sub == 1:
            return x
        return jnp.sum(x.reshape(sub, 8, LANES), axis=0)

    if need_mask:
        # Only the partial edge tile / fully-clamped redundant tiles need the
        # mask; interior tiles take the unmasked fast path at runtime.
        block_idx = s * steps_per_split + k   # unclamped logical block index
        is_interior = block_idx < full_blocks

        @pl.when(is_interior)
        def _():
            acc_pt_ref[...] += tree8(p * t)
            acc_s_ref[...] += tree8(p + t)

        @pl.when(block_idx >= full_blocks)
        def _():
            row_ids = block_idx * tile_rows + jax.lax.broadcasted_iota(
                jnp.int32, (tile_rows, LANES), 0)
            valid = row_ids < rows
            acc_pt_ref[...] += tree8(jnp.where(valid, p * t, 0.0))
            acc_s_ref[...] += tree8(jnp.where(valid, p + t, 0.0))
    else:
        acc_pt_ref[...] += tree8(p * t)
        acc_s_ref[...] += tree8(p + t)

    @pl.when(k == pl.num_programs(1) - 1)
    def _():
        # Lane-dense, unmasked stores of the (8,128) partial accumulators.
        o_ref[0:8, :] = acc_pt_ref[...]     # partial intersection terms
        o_ref[8:16, :] = acc_s_ref[...]     # partial sum(p) + sum(t) terms


def _has_multiple_tensorcores():
    """True only on chips where 'parallel' grid axes shard across TCs (v7x)."""
    try:
        kind = jax.devices()[0].device_kind.lower()
    except Exception:
        return False
    return "v7" in kind


def dice_loss(y_pred, y_true, smooth=1.0, *, max_tile_rows=None, force_splits=None):
    """Pallas TPU implementation of DiceLoss.forward. Returns a scalar f32."""
    assert y_pred.shape == y_true.shape, "y_pred / y_true must match in shape"

    # Flatten (torch .view(-1)); keep native dtype (upcast happens in-kernel,
    # halving HBM traffic for bf16 inputs).
    p_flat = jnp.ravel(y_pred)
    t_flat = jnp.ravel(y_true)
    n = p_flat.shape[0]

    # Lane dim must be 128; only a non-multiple-of-128 element count pays for
    # a (zero) pad copy.  Row raggedness is handled in-kernel, never by padding.
    n_lanes = pl.cdiv(n, LANES) * LANES
    if n_lanes != n:
        p_flat = jnp.pad(p_flat, (0, n_lanes - n))
        t_flat = jnp.pad(t_flat, (0, n_lanes - n))

    rows = n_lanes // LANES
    p2d = p_flat.reshape(rows, LANES)
    t2d = t_flat.reshape(rows, LANES)

    # --- Tile sizing: by bytes in the NATIVE dtype (~2 MiB per input tile) ---
    itemsize = jnp.dtype(p2d.dtype).itemsize
    cap_rows = max(8, (TARGET_TILE_BYTES // (LANES * itemsize)) // 8 * 8)
    if max_tile_rows is not None:
        cap_rows = min(cap_rows, max(8, (max_tile_rows // 8) * 8))
    tile_rows = min(cap_rows, ((rows + 7) // 8) * 8)     # multiple of 8
    row_blocks = pl.cdiv(rows, tile_rows)

    # --- Parallel split: v7x only (2 TCs), and only with enough blocks ---
    if force_splits is not None:
        splits = max(1, min(int(force_splits), row_blocks))
    elif _has_multiple_tensorcores() and row_blocks >= 8:
        splits = 2
    else:
        splits = 1
    steps_per_split = pl.cdiv(row_blocks, splits)

    # Masking needed iff the last tile is partial or the split produces
    # redundant (index-clamped) tiles.  full_blocks = # of fully-valid tiles.
    full_blocks = rows // tile_rows
    need_mask = (rows % tile_rows != 0) or (splits * steps_per_split != row_blocks)

    last_block = row_blocks - 1
    if splits * steps_per_split == row_blocks:
        def in_map(s, k):
            return (s * steps_per_split + k, 0)
    else:
        # Clamp so every DMA stays in bounds; the redundant (clamped) tile is
        # fully masked out inside the kernel.
        def in_map(s, k):
            return (jnp.minimum(s * steps_per_split + k, last_block), 0)

    # --- VMEM budget: 2 inputs x 2 buffers x tile + small fixed scratch ---
    tile_bytes = tile_rows * LANES * itemsize
    vmem_limit = int(min(max(4 * tile_bytes + (2 << 20), 16 << 20), 32 << 20))

    kernel = functools.partial(
        _dice_kernel, rows=rows, tile_rows=tile_rows,
        steps_per_split=steps_per_split, full_blocks=full_blocks,
        need_mask=need_mask)

    partials = pl.pallas_call(
        kernel,
        out_shape=jax.ShapeDtypeStruct((splits * 16, LANES), jnp.float32),
        grid_spec=pltpu.PrefetchScalarGridSpec(
            num_scalar_prefetch=0,
            grid=(splits, steps_per_split),
            in_specs=[
                pl.BlockSpec((tile_rows, LANES), in_map),
                pl.BlockSpec((tile_rows, LANES), in_map),
            ],
            out_specs=pl.BlockSpec((16, LANES), lambda s, k: (s, 0)),
            scratch_shapes=[
                pltpu.VMEM((8, LANES), jnp.float32),
                pltpu.VMEM((8, LANES), jnp.float32),
            ],
        ),
        compiler_params=pltpu.CompilerParams(
            dimension_semantics=("parallel", "arbitrary"),
            vmem_limit_bytes=vmem_limit,
        ),
    )(p2d, t2d)

    partials = partials.reshape(splits, 2, 8, LANES)
    intersection = jnp.sum(partials[:, 0])
    sum_pt = jnp.sum(partials[:, 1])
    smooth = jnp.float32(smooth)
    dice = (2.0 * intersection + smooth) / (sum_pt + smooth)
    return 1.0 - dice


def dice_loss_ref(y_pred, y_true, smooth=1.0):
    p = jnp.ravel(y_pred).astype(jnp.float32)
    t = jnp.ravel(y_true).astype(jnp.float32)
    inter = jnp.sum(p * t)
    return 1.0 - (2.0 * inter + smooth) / (jnp.sum(p) + jnp.sum(t) + smooth)


if __name__ == "__main__":
    key = jax.random.PRNGKey(0)
    k1, k2, k3, k4, k5, k6, k7, k8 = jax.random.split(key, 8)

    # Case 1: segmentation-style NCHW probabilities / masks (aligned, single
    # block, no mask, fast path).
    y_pred = jax.nn.sigmoid(jax.random.normal(k1, (2, 4, 16, 16), jnp.float32))
    y_true = (jax.random.uniform(k2, (2, 4, 16, 16)) > 0.5).astype(jnp.float32)
    loss = jax.block_until_ready(dice_loss(y_pred, y_true, smooth=1.0))
    ref = jax.block_until_ready(dice_loss_ref(y_pred, y_true, smooth=1.0))
    assert jnp.allclose(loss, ref, rtol=1e-5, atol=1e-6), (loss, ref)

    # Case 2: multiple row blocks + forced 2-way split with a clamped
    # redundant tile (3 blocks over 2 splits) — exercises the runtime-gated
    # mask and the per-split partial outputs.
    y_pred2 = jax.nn.sigmoid(jax.random.normal(k3, (2, 4, 24, 16), jnp.float32))
    y_true2 = (jax.random.uniform(k4, (2, 4, 24, 16)) > 0.5).astype(jnp.float32)
    loss2 = jax.block_until_ready(
        dice_loss(y_pred2, y_true2, smooth=1.0, max_tile_rows=8, force_splits=2))
    ref2 = jax.block_until_ready(dice_loss_ref(y_pred2, y_true2, smooth=1.0))
    assert jnp.allclose(loss2, ref2, rtol=1e-5, atol=1e-6), (loss2, ref2)

    # Case 3: ragged element count (not a multiple of 128) + partial edge tile
    # — exercises the masked (edge) path only.
    y_pred3 = jax.nn.sigmoid(jax.random.normal(k5, (2, 3, 5, 7), jnp.float32))
    y_true3 = (jax.random.uniform(k6, (2, 3, 5, 7)) > 0.5).astype(jnp.float32)
    loss3 = jax.block_until_ready(dice_loss(y_pred3, y_true3, smooth=1.0))
    ref3 = jax.block_until_ready(dice_loss_ref(y_pred3, y_true3, smooth=1.0))
    assert jnp.allclose(loss3, ref3, rtol=1e-5, atol=1e-6), (loss3, ref3)

    # Case 4: bf16 inputs, multi-step sequential reduction, no mask — checks
    # the native-dtype streaming + in-kernel upcast + tree-sum accumulation.
    y_pred4 = jax.nn.sigmoid(
        jax.random.normal(k7, (2, 4, 16, 16))).astype(jnp.bfloat16)
    y_true4 = (jax.random.uniform(k8, (2, 4, 16, 16)) > 0.5).astype(jnp.bfloat16)
    loss4 = jax.block_until_ready(
        dice_loss(y_pred4, y_true4, smooth=1.0, max_tile_rows=8))
    ref4 = jax.block_until_ready(dice_loss_ref(y_pred4, y_true4, smooth=1.0))
    assert jnp.allclose(loss4, ref4, rtol=1e-4, atol=1e-5), (loss4, ref4)

    print("KERNEL_OK")
</pallas_src>

<mosaic_0001>
module attributes {stable_mosaic.version = 11 : i64} {
  func.func @_dice_kernel(%arg0: i32, %arg1: i32, %arg2: memref<16x128xf32, #tpu.memory_space<vmem>>, %arg3: memref<16x128xf32, #tpu.memory_space<vmem>>, %arg4: memref<16x128xf32, #tpu.memory_space<vmem>>, %arg5: memref<8x128xf32, #tpu.memory_space<vmem>>, %arg6: memref<8x128xf32, #tpu.memory_space<vmem>>) attributes {dimension_semantics = [#tpu.dimension_semantics<parallel>, #tpu.dimension_semantics<arbitrary>], iteration_bounds = array<i64: 1, 1>, scalar_prefetch = 0 : i64, scratch_operands = 2 : i64, tpu.core_type = #tpu.core_type<tc>, window_params = [{transform_indices = @transform_0, window_bounds = array<i64: 16, 128>}, {transform_indices = @transform_1, window_bounds = array<i64: 16, 128>}, {transform_indices = @transform_2, window_bounds = array<i64: 16, 128>}]} {
    %c0_i32 = arith.constant 0 : i32
    %0 = arith.cmpi eq, %arg1, %c0_i32 : i32
    %1 = arith.extui %0 : i1 to i32
    %c0_i32_0 = arith.constant 0 : i32
    %2 = arith.cmpi ne, %1, %c0_i32_0 : i32
    scf.if %2 {
      %cst_15 = arith.constant 0.000000e+00 : f32
      %20 = vector.broadcast %cst_15 : f32 to vector<8x128xf32>
      %c0_16 = arith.constant 0 : index
      %c0_17 = arith.constant 0 : index
      %21 = vector.load %arg5[%c0_16, %c0_17] : memref<8x128xf32, #tpu.memory_space<vmem>>, vector<8x128xf32>
      tpu.vector_store %arg5[%c0_16, %c0_17], %20 {strides = array<i32>} : memref<8x128xf32, #tpu.memory_space<vmem>>, vector<8x128xf32>,
      %cst_18 = arith.constant 0.000000e+00 : f32
      %22 = vector.broadcast %cst_18 : f32 to vector<8x128xf32>
      %c0_19 = arith.constant 0 : index
      %c0_20 = arith.constant 0 : index
      %23 = vector.load %arg6[%c0_19, %c0_20] : memref<8x128xf32, #tpu.memory_space<vmem>>, vector<8x128xf32>
      tpu.vector_store %arg6[%c0_19, %c0_20], %22 {strides = array<i32>} : memref<8x128xf32, #tpu.memory_space<vmem>>, vector<8x128xf32>,
    } else {
    }
    %c0 = arith.constant 0 : index
    %c0_1 = arith.constant 0 : index
    %3 = vector.load %arg2[%c0, %c0_1] : memref<16x128xf32, #tpu.memory_space<vmem>>, vector<16x128xf32>
    %c0_2 = arith.constant 0 : index
    %c0_3 = arith.constant 0 : index
    %4 = vector.load %arg3[%c0_2, %c0_3] : memref<16x128xf32, #tpu.memory_space<vmem>>, vector<16x128xf32>
    %c0_4 = arith.constant 0 : index
    %c0_5 = arith.constant 0 : index
    %5 = vector.load %arg5[%c0_4, %c0_5] : memref<8x128xf32, #tpu.memory_space<vmem>>, vector<8x128xf32>
    %6 = arith.mulf %3, %4 : vector<16x128xf32>
    %7 = vector.shape_cast %6 : vector<16x128xf32> to vector<2x8x128xf32>
    %cst = arith.constant dense<0.000000e+00> : vector<8x128xf32>
    %8 = vector.multi_reduction <add>, %7, %cst [0] : vector<2x8x128xf32> to vector<8x128xf32>
    %9 = arith.addf %5, %8 : vector<8x128xf32>
    %c0_6 = arith.constant 0 : index
    %c0_7 = arith.constant 0 : index
    %10 = vector.load %arg5[%c0_6, %c0_7] : memref<8x128xf32, #tpu.memory_space<vmem>>, vector<8x128xf32>
    tpu.vector_store %arg5[%c0_6, %c0_7], %9 {strides = array<i32>} : memref<8x128xf32, #tpu.memory_space<vmem>>, vector<8x128xf32>,
    %c0_8 = arith.constant 0 : index
    %c0_9 = arith.constant 0 : index
    %11 = vector.load %arg6[%c0_8, %c0_9] : memref<8x128xf32, #tpu.memory_space<vmem>>, vector<8x128xf32>
    %12 = arith.addf %3, %4 : vector<16x128xf32>
    %13 = vector.shape_cast %12 : vector<16x128xf32> to vector<2x8x128xf32>
    %cst_10 = arith.constant dense<0.000000e+00> : vector<8x128xf32>
    %14 = vector.multi_reduction <add>, %13, %cst_10 [0] : vector<2x8x128xf32> to vector<8x128xf32>
    %15 = arith.addf %11, %14 : vector<8x128xf32>
    %c0_11 = arith.constant 0 : index
    %c0_12 = arith.constant 0 : index
    %16 = vector.load %arg6[%c0_11, %c0_12] : memref<8x128xf32, #tpu.memory_space<vmem>>, vector<8x128xf32>
    tpu.vector_store %arg6[%c0_11, %c0_12], %15 {strides = array<i32>} : memref<8x128xf32, #tpu.memory_space<vmem>>, vector<8x128xf32>,
    %c0_i32_13 = arith.constant 0 : i32
    %17 = arith.cmpi eq, %arg1, %c0_i32_13 : i32
    %18 = arith.extui %17 : i1 to i32
    %c0_i32_14 = arith.constant 0 : i32
    %19 = arith.cmpi ne, %18, %c0_i32_14 : i32
    scf.if %19 {
      %c0_15 = arith.constant 0 : index
      %c0_16 = arith.constant 0 : index
      %20 = vector.load %arg5[%c0_15, %c0_16] : memref<8x128xf32, #tpu.memory_space<vmem>>, vector<8x128xf32>
      %c0_17 = arith.constant 0 : index
      %c0_18 = arith.constant 0 : index
      %21 = vector.load %arg4[%c0_17, %c0_18] : memref<16x128xf32, #tpu.memory_space<vmem>>, vector<8x128xf32>
      tpu.vector_store %arg4[%c0_17, %c0_18], %20 {strides = array<i32>} : memref<16x128xf32, #tpu.memory_space<vmem>>, vector<8x128xf32>,
      %c0_19 = arith.constant 0 : index
      %c0_20 = arith.constant 0 : index
      %22 = vector.load %arg6[%c0_19, %c0_20] : memref<8x128xf32, #tpu.memory_space<vmem>>, vector<8x128xf32>
      %c8 = arith.constant 8 : index
      %c0_21 = arith.constant 0 : index
      %23 = vector.load %arg4[%c8, %c0_21] : memref<16x128xf32, #tpu.memory_space<vmem>>, vector<8x128xf32>
      tpu.vector_store %arg4[%c8, %c0_21], %22 {strides = array<i32>} : memref<16x128xf32, #tpu.memory_space<vmem>>, vector<8x128xf32>,
    } else {
    }
    return
  }
  func.func @transform_0(%arg0: i32, %arg1: i32) -> (i32, i32) {
    %c1_i32 = arith.constant 1 : i32
    %0 = arith.muli %arg0, %c1_i32 : i32
    %1 = arith.addi %0, %arg1 : i32
    %c0_i32 = arith.constant 0 : i32
    %c0_i32_0 = arith.constant 0 : i32
    return %1, %c0_i32 : i32, i32
  }
  func.func @transform_1(%arg0: i32, %arg1: i32) -> (i32, i32) {
    %c1_i32 = arith.constant 1 : i32
    %0 = arith.muli %arg0, %c1_i32 : i32
    %1 = arith.addi %0, %arg1 : i32
    %c0_i32 = arith.constant 0 : i32
    %c0_i32_0 = arith.constant 0 : i32
    return %1, %c0_i32 : i32, i32
  }
  func.func @transform_2(%arg0: i32, %arg1: i32) -> (i32, i32) {
    %c0_i32 = arith.constant 0 : i32
    %c0_i32_0 = arith.constant 0 : i32
    return %arg0, %c0_i32 : i32, i32
  }
}

</mosaic_0001>

<llo_original>
// kernel: tpu_custom_call.1
$region0: #{tpu_custom_call.1}
  #allocation0 [shape = 'u32[]', space=smem, size = 0x4, offset = 0x4, fixed_abs, tag = 'smem constant byte address 0x4 - core index']
  #allocation1 [shape = 'u32[144,128]{1,0:T(1,128)}', space=vmem, size = 0x12000, scoped, tag = 'internal scratch']
  #allocation2 [shape = 'f32[8,128]{1,0:T(8,128)}', space=vmem, size = 0x1000, scoped, tag = 'scratch operand']
  #allocation3 [shape = 'f32[8,128]{1,0:T(8,128)}', space=vmem, size = 0x1000, scoped, tag = 'scratch operand']
  %s0 = inlined_call_operand.hbm [shape: f32[16,128], index: 0, kind: input, shape index: {}]
  %s1 = inlined_call_operand.hbm [shape: f32[16,128], index: 1, kind: input, shape index: {}]
  %s2 = inlined_call_operand.hbm [shape: f32[16,128], index: 2, kind: output, shape index: {}]
  %s3 = sld [smem:[#allocation0]]
  $region34: #{tpu_custom_call.1} parent=0
    _
  %s5 = ssub.s32 1, %s3
  %s6 = scalar_select 0, %s5, %s3
  $region1: #{tpu_custom_call.1} parent=0
    #allocation4 [shape = 'u8[8192]{0}', space=vmem, size = 0x2000, scoped, tag = 'input window, operand 0, single buffered']
    #allocation5 [shape = 's32[1]{0}', space=sflag, size = 0x4, scoped, tag = 'scoped memory for tpu_custom_call.1']
    #allocation6 [shape = 's32[1]{0}', space=sflag, size = 0x4, scoped, tag = 'scoped memory for tpu_custom_call.1']
    #allocation7 [shape = 'u8[8192]{0}', space=vmem, size = 0x2000, scoped, tag = 'input window, operand 1, single buffered']
    #allocation8 [shape = 's32[1]{0}', space=sflag, size = 0x4, scoped, tag = 'scoped memory for tpu_custom_call.1']
    #allocation9 [shape = 'u8[8192]{0}', space=vmem, size = 0x2000, scoped, tag = 'output window, operand 0, single buffered']
    %7 = vsyncpa [#allocation5], 0
    %8 = vsyncpa [#allocation8], 0
    %9 = vsyncpa [#allocation6], 0
    // Predicated region
    $region2: #{tpu_custom_call.1} parent=1 // pred_check
      _
    $region3: #{tpu_custom_call.1} parent=1 // pred_check_branch
      %11 = sbr.rel (0) target = $region5
    $region4: #{tpu_custom_call.1} parent=1 // pred_region
      %s12 = sadd.s32 0, 0
      %s13 = smul.u32 2, %s12
      %s15 = ssub.s32 256, 256
      %16 = vsyncadd [#allocation5], %s15
      %s17 = smul.addr %s13, 128
      %s18 = scalar_lea.hbm %s0, %s17
      %s19 = sshll.u32 [#allocation4], 4
      %s20 = int_to_ptr.vmem [resolvable:$true] %s19
      %25 = dma.hbm_to_vmem [thread:$0]  %s18, 256, %s20, [#allocation5], 128, 128, 8
    $region5: #{tpu_custom_call.1} parent=1 // pred_fallthru
      _
    // Predicated region
    $region6: #{tpu_custom_call.1} parent=1 // pred_check
      _
    $region7: #{tpu_custom_call.1} parent=1 // pred_check_branch
      %27 = sbr.rel (0) target = $region9
    $region8: #{tpu_custom_call.1} parent=1 // pred_region
      %s28 = sadd.s32 0, 0
      %s29 = smul.u32 2, %s28
      %s31 = ssub.s32 256, 256
      %32 = vsyncadd [#allocation8], %s31
      %s33 = smul.addr %s29, 128
      %s34 = scalar_lea.hbm %s1, %s33
      %s35 = sshll.u32 [#allocation7], 4
      %s36 = int_to_ptr.vmem [resolvable:$true] %s35
      %41 = dma.hbm_to_vmem [thread:$0]  %s34, 256, %s36, [#allocation8], 128, 128, 8
    $region9: #{tpu_custom_call.1} parent=1 // pred_fallthru
      _
    // Predicated region
    $region10: #{tpu_custom_call.1} parent=1 // pred_check
      _
    $region11: #{tpu_custom_call.1} parent=1 // pred_check_branch
      %43 = sbr.rel (0) target = $region13
    $region12: #{tpu_custom_call.1} parent=1 // pred_region
      %44 = dma.done [#allocation5], 256
    $region13: #{tpu_custom_call.1} parent=1 // pred_fallthru
      _
    // Predicated region
    $region14: #{tpu_custom_call.1} parent=1 // pred_check
      _
    $region15: #{tpu_custom_call.1} parent=1 // pred_check_branch
      %46 = sbr.rel (0) target = $region17
    $region16: #{tpu_custom_call.1} parent=1 // pred_region
      %47 = dma.done [#allocation8], 256
    $region17: #{tpu_custom_call.1} parent=1 // pred_fallthru
      _
    %s48 = sadd.s32 0, 0
    %s49 = smul.u32 2, %s48
    %s50 = sadd.s32 0, 0
    %s51 = smul.u32 2, %s50
    %p52 = scmp.eq.s32.totalorder 0, 0
    // Predicated region
    $region18: #{tpu_custom_call.1} parent=1 // pred_check
      %p53 = pneg %p52
    $region19: #{tpu_custom_call.1} parent=1 // pred_check_branch
      %55 = sbr.rel (%p53) target = $region21
    $region20: #{tpu_custom_call.1} parent=1 // pred_region
      %56 = vst [vmem:[#allocation2] sm:$0xff] 0.0
      %57 = vst [vmem:[#allocation3] sm:$0xff] 0.0
    $region21: #{tpu_custom_call.1} parent=1 // pred_fallthru
      _
    %v58 = vld [vmem:[#allocation4] sm:$0xff]
    %v59 = vld [vmem:[#allocation4 + $0x8] sm:$0xff]
    %v60 = vld [vmem:[#allocation7] sm:$0xff]
    %v61 = vld [vmem:[#allocation7 + $0x8] sm:$0xff]
    %v62 = vld [vmem:[#allocation2] sm:$0xff]
    %v63 = vmul.f32 %v58, %v60
    %v64 = vmul.f32 %v59, %v61
    %v65 = vadd.f32 %v63, %v64
    %v66 = vadd.f32 %v62, %v65
    %67 = vst [vmem:[#allocation2] sm:$0xff] %v66
    %v68 = vld [vmem:[#allocation3] sm:$0xff]
    %v69 = vadd.f32 %v58, %v60
    %v70 = vadd.f32 %v59, %v61
    %v71 = vadd.f32 %v69, %v70
    %v72 = vadd.f32 %v68, %v71
    %73 = vst [vmem:[#allocation3] sm:$0xff] %v72
    // Predicated region
    $region22: #{tpu_custom_call.1} parent=1 // pred_check
      %p74 = pneg %p52
    $region23: #{tpu_custom_call.1} parent=1 // pred_check_branch
      %76 = sbr.rel (%p74) target = $region25
    $region24: #{tpu_custom_call.1} parent=1 // pred_region
      %v77 = vld [vmem:[#allocation2] sm:$0xff]
      %78 = vst [vmem:[#allocation9] sm:$0xff] %v77
      %v79 = vld [vmem:[#allocation3] sm:$0xff]
      %80 = vst [vmem:[#allocation9 + $0x8] sm:$0xff] %v79
    $region25: #{tpu_custom_call.1} parent=1 // pred_fallthru
      _
    // Predicated region
    $region26: #{tpu_custom_call.1} parent=1 // pred_check
      _
    $region27: #{tpu_custom_call.1} parent=1 // pred_check_branch
      %82 = sbr.rel (0) target = $region29
    $region28: #{tpu_custom_call.1} parent=1 // pred_region
      %s84 = ssub.s32 256, 256
      %85 = vsyncadd [#allocation6], %s84
      %s86 = sshll.u32 [#allocation9], 4
      %s87 = int_to_ptr.vmem [resolvable:$true] %s86
      %92 = dma.vmem_to_hbm [thread:$0]  %s87, 256, %s2, [#allocation6], 128, 128, 8
    $region29: #{tpu_custom_call.1} parent=1 // pred_fallthru
      _
    // Predicated region
    $region30: #{tpu_custom_call.1} parent=1 // pred_check
      _
    $region31: #{tpu_custom_call.1} parent=1 // pred_check_branch
      %94 = sbr.rel (0) target = $region33
    $region32: #{tpu_custom_call.1} parent=1 // pred_region
      %95 = dma.done [#allocation6], 256
    $region33: #{tpu_custom_call.1} parent=1 // pred_fallthru
      _
    %96 = vsyncpa [#allocation5], 1
    %97 = vsyncpa [#allocation8], 1
    %98 = vsyncpa [#allocation6], 1

</llo_original>
